<compile_context>
chip_gen: v5e
topology: v5e:2x2
jax: 0.10.0
libtpu: 0.0.40
codegen_flags: <defaults>
</compile_context>

<pallas_src>
import functools

import jax
import jax.numpy as jnp
from jax.experimental import pallas as pl
from jax.experimental.pallas import tpu as pltpu


# ----------------------------------------------------------------------------
# Tile-size helpers: largest multiple-of-`step` divisor of `dim` that is <= cap.
# ----------------------------------------------------------------------------
def _largest_tile(dim, cap, step=128):
    if dim <= cap:
        return dim
    t = (cap // step) * step
    while t >= step:
        if dim % t == 0:
            return t
        t -= step
    return dim  # no nice divisor found: fall back to the full dimension


def _hidden_split(hidden):
    # Split the hidden/output columns of layer 1 into 128-wide halves when possible
    # so megacore (v7x) has a parallel axis to shard.
    if hidden > 128 and hidden % 128 == 0:
        return 128
    return hidden


# ----------------------------------------------------------------------------
# Kernel 1: Linear(E -> H) + ReLU.
#   grid = (H // tile_h  [parallel],  E // tile_k  [arbitrary, reduction last])
#   bf16 matmul operands, f32 accumulation in VMEM scratch, f32 bias + ReLU.
# ----------------------------------------------------------------------------
def _linear_relu_kernel(x_ref, w_ref, b_ref, o_ref, acc_ref):
    k = pl.program_id(1)

    @pl.when(k == 0)
    def _():
        acc_ref[...] = jnp.zeros_like(acc_ref)

    acc_ref[...] += jnp.dot(
        x_ref[...], w_ref[...], preferred_element_type=jnp.float32
    )

    @pl.when(k == pl.num_programs(1) - 1)
    def _():
        o_ref[...] = jnp.maximum(acc_ref[...] + b_ref[...], 0.0).astype(o_ref.dtype)


def linear_relu(x, w, b, *, tile_k_cap=4096):
    """x: (B, E) bf16, w: (E, H) bf16, b: (1, H) f32  ->  (B, H) f32."""
    B, E = x.shape
    _, H = w.shape
    tile_k = _largest_tile(E, tile_k_cap)
    tile_h = _hidden_split(H)
    assert E % tile_k == 0 and H % tile_h == 0
    return pl.pallas_call(
        _linear_relu_kernel,
        out_shape=jax.ShapeDtypeStruct((B, H), jnp.float32),
        grid_spec=pltpu.PrefetchScalarGridSpec(
            num_scalar_prefetch=0,
            grid=(H // tile_h, E // tile_k),          # reduction axis last
            in_specs=[
                pl.BlockSpec((B, tile_k), lambda j, k: (0, k)),       # x tile
                pl.BlockSpec((tile_k, tile_h), lambda j, k: (k, j)),  # W1 tile
                pl.BlockSpec((1, tile_h), lambda j, k: (0, j)),       # bias tile
            ],
            out_specs=pl.BlockSpec((B, tile_h), lambda j, k: (0, j)),
            scratch_shapes=[pltpu.VMEM((B, tile_h), jnp.float32)],
        ),
        compiler_params=pltpu.CompilerParams(
            dimension_semantics=("parallel", "arbitrary"),
        ),
    )(x, w, b)


# ----------------------------------------------------------------------------
# Kernel 2: Linear(H -> D) + Tanh, tiled over the (large) output axis D.
#   bf16 matmul operands, f32 accumulate / bias / tanh, lane-dense output tile.
# ----------------------------------------------------------------------------
def _linear_tanh_kernel(h_ref, w_ref, b_ref, o_ref):
    y = jnp.dot(h_ref[...], w_ref[...], preferred_element_type=jnp.float32)
    o_ref[...] = jnp.tanh(y + b_ref[...]).astype(o_ref.dtype)


def linear_tanh(h, w, b, *, tile_n_cap=3072):
    """h: (B, H) bf16, w: (H, D) bf16, b: (1, D) f32  ->  (B, D) f32."""
    B, H = h.shape
    _, D = w.shape
    tile_n = _largest_tile(D, tile_n_cap)   # 3072 divides 150528 = 224*224*3
    assert D % tile_n == 0
    return pl.pallas_call(
        _linear_tanh_kernel,
        out_shape=jax.ShapeDtypeStruct((B, D), jnp.float32),
        grid_spec=pltpu.PrefetchScalarGridSpec(
            num_scalar_prefetch=0,
            grid=(D // tile_n,),
            in_specs=[
                pl.BlockSpec((B, H), lambda j: (0, 0)),        # hidden (resident)
                pl.BlockSpec((H, tile_n), lambda j: (0, j)),   # W2 tile
                pl.BlockSpec((1, tile_n), lambda j: (0, j)),   # bias tile
            ],
            out_specs=pl.BlockSpec((B, tile_n), lambda j: (0, j)),
        ),
        compiler_params=pltpu.CompilerParams(
            dimension_semantics=("parallel",),
        ),
    )(h, w, b)


# ----------------------------------------------------------------------------
# ImageDecoder forward (parameter setup + reshapes are plain JAX glue).
# ----------------------------------------------------------------------------
def init_params(key, embedding_dim, hidden_dim, out_dim):
    """Deterministic init mimicking nn.Linear default (uniform +/- 1/sqrt(fan_in))."""
    k1, k2, k3, k4 = jax.random.split(key, 4)
    lim1 = 1.0 / jnp.sqrt(embedding_dim)
    lim2 = 1.0 / jnp.sqrt(hidden_dim)
    w1 = jax.random.uniform(k1, (embedding_dim, hidden_dim), jnp.float32, -lim1, lim1)
    b1 = jax.random.uniform(k2, (1, hidden_dim), jnp.float32, -lim1, lim1)
    w2 = jax.random.uniform(k3, (hidden_dim, out_dim), jnp.float32, -lim2, lim2)
    b2 = jax.random.uniform(k4, (1, out_dim), jnp.float32, -lim2, lim2)
    return w1, b1, w2, b2


@functools.partial(jax.jit, static_argnames=("embedding_dim", "channels", "img_hw"))
def image_decoder_forward(x, w1, b1, w2, b2, *, embedding_dim, channels, img_hw):
    # Cast matmul operands to bf16 (halves HBM weight traffic; f32 accumulation and
    # f32 bias/ReLU/tanh preserve numerics within bf16-input precision).  Weights
    # passed in as bf16 already are untouched (no-op astype under jit).
    x = x.reshape(-1, embedding_dim).astype(jnp.bfloat16)   # x.view(-1, embedding_dim)
    w1 = w1.astype(jnp.bfloat16)
    w2 = w2.astype(jnp.bfloat16)
    h = linear_relu(x, w1, b1)                               # Linear + ReLU  (Pallas), f32 out
    y = linear_tanh(h.astype(jnp.bfloat16), w2, b2)          # Linear + Tanh  (Pallas), f32 out
    return y.reshape(-1, channels, img_hw, img_hw)           # x.view(-1, 3, H, W), NCHW


if __name__ == "__main__":
    # Small shapes consistent with the module's forward.
    # (Full-size module: embedding_dim=256*384=98304, hidden=256, image=(3, 224, 224);
    #  the tile caps 4096 / 3072 divide those dims evenly.)
    B = 2
    EMBEDDING_DIM = 512
    HIDDEN = 256
    CHANNELS, IMG = 3, 16
    OUT_DIM = CHANNELS * IMG * IMG  # 768, multiple of 128

    key = jax.random.PRNGKey(0)
    kx, kp = jax.random.split(key)
    x = jax.random.normal(kx, (B, EMBEDDING_DIM), jnp.float32)
    w1, b1, w2, b2 = init_params(kp, EMBEDDING_DIM, HIDDEN, OUT_DIM)

    # Store the big weights in bf16 up front (what a real deployment would do)
    # so the forward does not re-cast the full f32 weights every call.
    w1_bf16 = w1.astype(jnp.bfloat16)
    w2_bf16 = w2.astype(jnp.bfloat16)

    out = image_decoder_forward(
        x, w1_bf16, b1, w2_bf16, b2,
        embedding_dim=EMBEDDING_DIM, channels=CHANNELS, img_hw=IMG,
    )
    out = jax.block_until_ready(out)
    assert out.shape == (B, CHANNELS, IMG, IMG), out.shape

    # Reference check: emulate the bf16-operand / f32-accumulate pipeline in pure JAX.
    xb = x.reshape(-1, EMBEDDING_DIM).astype(jnp.bfloat16).astype(jnp.float32)
    w1f = w1_bf16.astype(jnp.float32)
    w2f = w2_bf16.astype(jnp.float32)
    ref_h = jnp.maximum(xb @ w1f + b1, 0.0)
    ref_hb = ref_h.astype(jnp.bfloat16).astype(jnp.float32)
    ref = jnp.tanh(ref_hb @ w2f + b2).reshape(-1, CHANNELS, IMG, IMG)
    assert jnp.allclose(out, ref, atol=5e-3, rtol=5e-3)

    # Sanity vs the pure-f32 PyTorch-equivalent math (loose tolerance: bf16 operands).
    ref32 = jnp.tanh(
        jnp.maximum(x.reshape(-1, EMBEDDING_DIM) @ w1 + b1, 0.0) @ w2 + b2
    ).reshape(-1, CHANNELS, IMG, IMG)
    assert jnp.allclose(out, ref32, atol=3e-2, rtol=3e-2)

    print("KERNEL_OK")
</pallas_src>

<mosaic_0001>
module attributes {stable_mosaic.version = 11 : i64} {
  func.func @_linear_tanh_kernel(%arg0: i32, %arg1: memref<2x256xbf16, #tpu.memory_space<vmem>>, %arg2: memref<256x768xbf16, #tpu.memory_space<vmem>>, %arg3: memref<1x768xf32, #tpu.memory_space<vmem>>, %arg4: memref<2x768xf32, #tpu.memory_space<vmem>>) attributes {dimension_semantics = [#tpu.dimension_semantics<parallel>], iteration_bounds = array<i64: 1>, scalar_prefetch = 0 : i64, scratch_operands = 0 : i64, tpu.core_type = #tpu.core_type<tc>, window_params = [{pipeline_mode = #tpu.pipeline_mode<synchronous>, transform_indices = @transform_0, window_bounds = array<i64: 2, 256>}, {transform_indices = @transform_1, window_bounds = array<i64: 256, 768>}, {transform_indices = @transform_2, window_bounds = array<i64: 1, 768>}, {transform_indices = @transform_3, window_bounds = array<i64: 2, 768>}]} {
    %c0 = arith.constant 0 : index
    %c0_0 = arith.constant 0 : index
    %0 = vector.load %arg1[%c0, %c0_0] : memref<2x256xbf16, #tpu.memory_space<vmem>>, vector<2x256xbf16>
    %c0_1 = arith.constant 0 : index
    %c0_2 = arith.constant 0 : index
    %1 = vector.load %arg2[%c0_1, %c0_2] : memref<256x768xbf16, #tpu.memory_space<vmem>>, vector<256x768xbf16>
    %cst = arith.constant dense<0.000000e+00> : vector<2x768xf32>
    %2 = tpu.matmul %0, %1, %cst {dimension_numbers = #tpu.dot_dimension_numbers<[1], [0], [0], [1], [0, 0, 1, 1], [], []>} : vector<2x256xbf16>, vector<256x768xbf16>, vector<2x768xf32> -> vector<2x768xf32>
    %c0_3 = arith.constant 0 : index
    %c0_4 = arith.constant 0 : index
    %3 = vector.load %arg3[%c0_3, %c0_4] : memref<1x768xf32, #tpu.memory_space<vmem>>, vector<1x768xf32>
    %4 = vector.broadcast %3 : vector<1x768xf32> to vector<2x768xf32>
    %5 = arith.addf %2, %4 : vector<2x768xf32>
    %6 = math.tanh %5 : vector<2x768xf32>
    %c0_5 = arith.constant 0 : index
    %c0_6 = arith.constant 0 : index
    %7 = vector.load %arg4[%c0_5, %c0_6] : memref<2x768xf32, #tpu.memory_space<vmem>>, vector<2x768xf32>
    tpu.vector_store %arg4[%c0_5, %c0_6], %6 {strides = array<i32>} : memref<2x768xf32, #tpu.memory_space<vmem>>, vector<2x768xf32>,
    return
  }
  func.func @transform_0(%arg0: i32) -> (i32, i32) {
    %c0_i32 = arith.constant 0 : i32
    %c0_i32_0 = arith.constant 0 : i32
    %c0_i32_1 = arith.constant 0 : i32
    return %c0_i32, %c0_i32_0 : i32, i32
  }
  func.func @transform_1(%arg0: i32) -> (i32, i32) {
    %c0_i32 = arith.constant 0 : i32
    %c0_i32_0 = arith.constant 0 : i32
    return %c0_i32, %arg0 : i32, i32
  }
  func.func @transform_2(%arg0: i32) -> (i32, i32) {
    %c0_i32 = arith.constant 0 : i32
    %c0_i32_0 = arith.constant 0 : i32
    return %c0_i32, %arg0 : i32, i32
  }
  func.func @transform_3(%arg0: i32) -> (i32, i32) {
    %c0_i32 = arith.constant 0 : i32
    %c0_i32_0 = arith.constant 0 : i32
    return %c0_i32, %arg0 : i32, i32
  }
}

module attributes {stable_mosaic.version = 11 : i64} {
  func.func @_linear_relu_kernel(%arg0: i32, %arg1: i32, %arg2: memref<2x512xbf16, #tpu.memory_space<vmem>>, %arg3: memref<512x128xbf16, #tpu.memory_space<vmem>>, %arg4: memref<1x128xf32, #tpu.memory_space<vmem>>, %arg5: memref<2x128xf32, #tpu.memory_space<vmem>>, %arg6: memref<2x128xf32, #tpu.memory_space<vmem>>) attributes {dimension_semantics = [#tpu.dimension_semantics<parallel>, #tpu.dimension_semantics<arbitrary>], iteration_bounds = array<i64: 2, 1>, scalar_prefetch = 0 : i64, scratch_operands = 1 : i64, tpu.core_type = #tpu.core_type<tc>, window_params = [{transform_indices = @transform_0, window_bounds = array<i64: 2, 512>}, {transform_indices = @transform_1, window_bounds = array<i64: 512, 128>}, {transform_indices = @transform_2, window_bounds = array<i64: 1, 128>}, {transform_indices = @transform_3, window_bounds = array<i64: 2, 128>}]} {
    %c0_i32 = arith.constant 0 : i32
    %0 = arith.cmpi eq, %arg1, %c0_i32 : i32
    %1 = arith.extui %0 : i1 to i32
    %c0_i32_0 = arith.constant 0 : i32
    %2 = arith.cmpi ne, %1, %c0_i32_0 : i32
    scf.if %2 {
      %cst_10 = arith.constant 0.000000e+00 : f32
      %12 = vector.broadcast %cst_10 : f32 to vector<2x128xf32>
      %c0_11 = arith.constant 0 : index
      %c0_12 = arith.constant 0 : index
      %13 = vector.load %arg6[%c0_11, %c0_12] : memref<2x128xf32, #tpu.memory_space<vmem>>, vector<2x128xf32>
      tpu.vector_store %arg6[%c0_11, %c0_12], %12 {strides = array<i32>} : memref<2x128xf32, #tpu.memory_space<vmem>>, vector<2x128xf32>,
    } else {
    }
    %c0 = arith.constant 0 : index
    %c0_1 = arith.constant 0 : index
    %3 = vector.load %arg6[%c0, %c0_1] : memref<2x128xf32, #tpu.memory_space<vmem>>, vector<2x128xf32>
    %c0_2 = arith.constant 0 : index
    %c0_3 = arith.constant 0 : index
    %4 = vector.load %arg2[%c0_2, %c0_3] : memref<2x512xbf16, #tpu.memory_space<vmem>>, vector<2x512xbf16>
    %c0_4 = arith.constant 0 : index
    %c0_5 = arith.constant 0 : index
    %5 = vector.load %arg3[%c0_4, %c0_5] : memref<512x128xbf16, #tpu.memory_space<vmem>>, vector<512x128xbf16>
    %cst = arith.constant dense<0.000000e+00> : vector<2x128xf32>
    %6 = tpu.matmul %4, %5, %cst {dimension_numbers = #tpu.dot_dimension_numbers<[1], [0], [0], [1], [0, 0, 1, 1], [], []>} : vector<2x512xbf16>, vector<512x128xbf16>, vector<2x128xf32> -> vector<2x128xf32>
    %7 = arith.addf %3, %6 : vector<2x128xf32>
    %c0_6 = arith.constant 0 : index
    %c0_7 = arith.constant 0 : index
    %8 = vector.load %arg6[%c0_6, %c0_7] : memref<2x128xf32, #tpu.memory_space<vmem>>, vector<2x128xf32>
    tpu.vector_store %arg6[%c0_6, %c0_7], %7 {strides = array<i32>} : memref<2x128xf32, #tpu.memory_space<vmem>>, vector<2x128xf32>,
    %c0_i32_8 = arith.constant 0 : i32
    %9 = arith.cmpi eq, %arg1, %c0_i32_8 : i32
    %10 = arith.extui %9 : i1 to i32
    %c0_i32_9 = arith.constant 0 : i32
    %11 = arith.cmpi ne, %10, %c0_i32_9 : i32
    scf.if %11 {
      %c0_10 = arith.constant 0 : index
      %c0_11 = arith.constant 0 : index
      %12 = vector.load %arg6[%c0_10, %c0_11] : memref<2x128xf32, #tpu.memory_space<vmem>>, vector<2x128xf32>
      %c0_12 = arith.constant 0 : index
      %c0_13 = arith.constant 0 : index
      %13 = vector.load %arg4[%c0_12, %c0_13] : memref<1x128xf32, #tpu.memory_space<vmem>>, vector<1x128xf32>
      %14 = vector.broadcast %13 : vector<1x128xf32> to vector<2x128xf32>
      %15 = arith.addf %12, %14 : vector<2x128xf32>
      %cst_14 = arith.constant 0.000000e+00 : f32
      %16 = vector.broadcast %cst_14 : f32 to vector<2x128xf32>
      %17 = arith.maximumf %15, %16 : vector<2x128xf32>
      %c0_15 = arith.constant 0 : index
      %c0_16 = arith.constant 0 : index
      %18 = vector.load %arg5[%c0_15, %c0_16] : memref<2x128xf32, #tpu.memory_space<vmem>>, vector<2x128xf32>
      tpu.vector_store %arg5[%c0_15, %c0_16], %17 {strides = array<i32>} : memref<2x128xf32, #tpu.memory_space<vmem>>, vector<2x128xf32>,
    } else {
    }
    return
  }
  func.func @transform_0(%arg0: i32, %arg1: i32) -> (i32, i32) {
    %c0_i32 = arith.constant 0 : i32
    %c0_i32_0 = arith.constant 0 : i32
    return %c0_i32, %arg1 : i32, i32
  }
  func.func @transform_1(%arg0: i32, %arg1: i32) -> (i32, i32) {
    %c0_i32 = arith.constant 0 : i32
    return %arg1, %arg0 : i32, i32
  }
  func.func @transform_2(%arg0: i32, %arg1: i32) -> (i32, i32) {
    %c0_i32 = arith.constant 0 : i32
    %c0_i32_0 = arith.constant 0 : i32
    return %c0_i32, %arg0 : i32, i32
  }
  func.func @transform_3(%arg0: i32, %arg1: i32) -> (i32, i32) {
    %c0_i32 = arith.constant 0 : i32
    %c0_i32_0 = arith.constant 0 : i32
    return %c0_i32, %arg0 : i32, i32
  }
}

</mosaic_0001>

<llo_original>
// kernel: image_decoder_forward.2
$region0: #{image_decoder_forward.2}
  #allocation0 [shape = 'u32[]', space=smem, size = 0x4, offset = 0x4, fixed_abs, tag = 'smem constant byte address 0x4 - core index']
  #allocation1 [shape = 'u32[72,128]{1,0:T(1,128)}', space=vmem, size = 0x9000, scoped, tag = 'internal scratch']
  #allocation2 [shape = 'f32[2,128]{1,0:T(2,128)}', space=vmem, size = 0x400, scoped, tag = 'scratch operand']
  %s0 = inlined_call_operand.vmem [shape: bf16[2,512], index: 0, kind: input, shape index: {}]
  %s1 = inlined_call_operand.hbm [shape: bf16[512,256], index: 1, kind: input, shape index: {}]
  %s2 = inlined_call_operand.vmem [shape: f32[1,256], index: 2, kind: input, shape index: {}]
  %s3 = inlined_call_operand.vmem [shape: f32[2,256], index: 3, kind: output, shape index: {}]
  %s4 = sld [smem:[#allocation0]]
  $region57: #{image_decoder_forward.2} parent=0
    _
  %s6 = ssub.s32 1, %s4
  %s7 = scalar_select 0, %s6, %s4
  $region1: #{image_decoder_forward.2} parent=0
    #allocation3 [shape = 'u8[262144]{0}', space=vmem, size = 0x40000, scoped, tag = 'input window, operand 1']
    #allocation4 [shape = 's32[2]{0}', space=sflag, size = 0x8, scoped, tag = 'scoped memory for image_decoder_forward.2']
    %8 = vsyncpa [#allocation4], 0
    %s9 = scalar_lea.sflag [#allocation4], 1
    %10 = vsyncpa %s9, 0
    loop: start=0, step=1, limit=4
    $region2: #{image_decoder_forward.2} parent=1 // loop_pre_header
      _
    $region3: #{image_decoder_forward.2} parent=1 // loop_header
      %s12 = sphi 0, %s16
      %p13 = scmp.ge.s32.totalorder %s12, 4
      %s19 = sphi 0, %s31
      %s20 = sphi 0, %s27
      %s21 = sphi 0, %s19
      %s22 = sphi 0, %s20
      %s23 = sphi 0, %s21
      %s24 = sphi 0, %s22
      %s34 = sphi 0, %s36
      %s37 = sphi 0, %s34
      %s38 = sphi 0, %s37
      %s54 = sphi 0, %s38
      %s62 = sphi 0, %s64
      %s65 = sphi 0, %s62
      %s66 = sphi 0, %s65
      %s82 = sphi 0, %s66
      %s88 = sphi 0, %s90
      %s91 = sphi 0, %s88
      %s92 = sphi 0, %s91
      %s108 = sphi 0, %s92
      %s114 = sphi 0, %s116
      %s117 = sphi 0, %s114
      %s118 = sphi 0, %s117
      %s134 = sphi 0, %s118
    $region4: #{image_decoder_forward.2} parent=1 // loop_header_branch
      %15 = sbr.rel (%p13) target = $region8
    $region5: #{image_decoder_forward.2} parent=1 // loop_body
      %s17 = ssub.s32 %s12, 1
      %s18 = ssub.s32 %s12, 2
      %s25 = sadd.s32 1, %s20
      %p26 = scmp.ge.s32.totalorder %s25, 1
      %s27 = scalar_select %p26, 0, %s25
      %s28 = sadd.s32 1, %s19
      %s29 = scalar_select %p26, %s28, %s19
      %p30 = scmp.ge.s32.totalorder %s29, 2
      %s31 = scalar_select %p30, 0, %s29
      %s32 = ssub.s32 %s20, %s27
      %p33 = scmp.eq.s32.totalorder %s32, 0
      %s35 = sadd.s32 %s34, 1
      %s36 = scalar_select %p33, %s34, %s35
      %p39 = pneg %p33
      %p40 = scmp.eq.s32.totalorder %s12, 1
      %p41 = por %p39, %p40
      %p42 = scmp.ne.s32.totalorder %s34, %s37
      %p43 = scmp.eq.s32.totalorder %s12, 0
      %p44 = por %p42, %p43
      %p45 = scmp.ne.s32.totalorder %s34, %s37
      %p46 = scmp.eq.s32.totalorder %s17, 1
      %p47 = por %p45, %p46
      %p48 = scmp.ne.s32.totalorder %s37, %s38
      %p49 = scmp.eq.s32.totalorder %s17, 0
      %p50 = por %p48, %p49
      %p51 = scmp.ne.s32.totalorder %s37, %s38
      %p52 = scmp.eq.s32.totalorder %s18, 1
      %p53 = por %p51, %p52
      %p55 = scmp.ne.s32.totalorder %s38, %s54
      %p56 = scmp.eq.s32.totalorder %s18, 0
      %p57 = por %p55, %p56
      %s58 = ssub.s32 %s20, %s27
      %s59 = ssub.s32 %s19, %s31
      %s60 = sor.u32 %s58, %s59
      %p61 = scmp.eq.s32.totalorder %s60, 0
      %s63 = sadd.s32 %s62, 1
      %s64 = scalar_select %p61, %s62, %s63
      %p67 = pneg %p61
      %p68 = scmp.eq.s32.totalorder %s12, 1
      %p69 = por %p67, %p68
      %p70 = scmp.ne.s32.totalorder %s62, %s65
      %p71 = scmp.eq.s32.totalorder %s12, 0
      %p72 = por %p70, %p71
      %p73 = scmp.ne.s32.totalorder %s62, %s65
      %p74 = scmp.eq.s32.totalorder %s17, 1
      %p75 = por %p73, %p74
      %p76 = scmp.ne.s32.totalorder %s65, %s66
      %p77 = scmp.eq.s32.totalorder %s17, 0
      %p78 = por %p76, %p77
      %p79 = scmp.ne.s32.totalorder %s65, %s66
      %p80 = scmp.eq.s32.totalorder %s18, 1
      %p81 = por %p79, %p80
      %p83 = scmp.ne.s32.totalorder %s66, %s82
      %p84 = scmp.eq.s32.totalorder %s18, 0
      %p85 = por %p83, %p84
      %s86 = ssub.s32 %s19, %s31
      %p87 = scmp.eq.s32.totalorder %s86, 0
      %s89 = sadd.s32 %s88, 1
      %s90 = scalar_select %p87, %s88, %s89
      %p93 = pneg %p87
      %p94 = scmp.eq.s32.totalorder %s12, 1
      %p95 = por %p93, %p94
      %p96 = scmp.ne.s32.totalorder %s88, %s91
      %p97 = scmp.eq.s32.totalorder %s12, 0
      %p98 = por %p96, %p97
      %p99 = scmp.ne.s32.totalorder %s88, %s91
      %p100 = scmp.eq.s32.totalorder %s17, 1
      %p101 = por %p99, %p100
      %p102 = scmp.ne.s32.totalorder %s91, %s92
      %p103 = scmp.eq.s32.totalorder %s17, 0
      %p104 = por %p102, %p103
      %p105 = scmp.ne.s32.totalorder %s91, %s92
      %p106 = scmp.eq.s32.totalorder %s18, 1
      %p107 = por %p105, %p106
      %p109 = scmp.ne.s32.totalorder %s92, %s108
      %p110 = scmp.eq.s32.totalorder %s18, 0
      %p111 = por %p109, %p110
      %s112 = ssub.s32 %s19, %s31
      %p113 = scmp.eq.s32.totalorder %s112, 0
      %s115 = sadd.s32 %s114, 1
      %s116 = scalar_select %p113, %s114, %s115
      %p119 = pneg %p113
      %p120 = scmp.eq.s32.totalorder %s12, 1
      %p121 = por %p119, %p120
      %p122 = scmp.ne.s32.totalorder %s114, %s117
      %p123 = scmp.eq.s32.totalorder %s12, 0
      %p124 = por %p122, %p123
      %p125 = scmp.ne.s32.totalorder %s114, %s117
      %p126 = scmp.eq.s32.totalorder %s17, 1
      %p127 = por %p125, %p126
      %p128 = scmp.ne.s32.totalorder %s117, %s118
      %p129 = scmp.eq.s32.totalorder %s17, 0
      %p130 = por %p128, %p129
      %p131 = scmp.ne.s32.totalorder %s117, %s118
      %p132 = scmp.eq.s32.totalorder %s18, 1
      %p133 = por %p131, %p132
      %p135 = scmp.ne.s32.totalorder %s118, %s134
      %p136 = scmp.eq.s32.totalorder %s18, 0
      %p137 = por %p135, %p136
      %p138 = scmp.le.s32.totalorder 1, %s12
      %p139 = scmp.lt.s32.totalorder %s12, 3
      %p140 = pnand %p138, %p139
      %p141 = pneg %p140
      // Predicated region
      $region9: #{image_decoder_forward.2} parent=5 // pred_check
        _
      $region10: #{image_decoder_forward.2} parent=5 // pred_check_branch
        %143 = sbr.rel (%p140) target = $region12
      $region11: #{image_decoder_forward.2} parent=5 // pred_region
        %s144 = ssub.s32 %s12, 1
        // Predicated region
        $region13: #{image_decoder_forward.2} parent=11 // pred_check
          %p145 = pneg %p50
        $region14: #{image_decoder_forward.2} parent=11 // pred_check_branch
          %147 = sbr.rel (%p145) target = $region16
        $region15: #{image_decoder_forward.2} parent=11 // pred_region
          %s148 = smul.u32 4, %s22
          %p149 = scmp.lt.s32.totalorder %s148, 3
          %s150 = scalar_select %p149, %s148, 3
          %s151 = scalar_lea.vmem %s0, %s150
          %s152 = smul.u32 4, %s22
        $region16: #{image_decoder_forward.2} parent=11 // pred_fallthru
          _
      $region12: #{image_decoder_forward.2} parent=5 // pred_fallthru
        _
      %p153 = scmp.lt.s32.totalorder %s12, 2
      // Predicated region
      $region17: #{image_decoder_forward.2} parent=5 // pred_check
        %p154 = pneg %p153
      $region18: #{image_decoder_forward.2} parent=5 // pred_check_branch
        %156 = sbr.rel (%p154) target = $region20
      $region19: #{image_decoder_forward.2} parent=5 // pred_region
        // Predicated region
        $region21: #{image_decoder_forward.2} parent=19 // pred_check
          %p157 = pneg %p72
        $region22: #{image_decoder_forward.2} parent=19 // pred_check_branch
          %159 = sbr.rel (%p157) target = $region24
        $region23: #{image_decoder_forward.2} parent=19 // pred_region
          %s160 = sand.u32 %s62, 1
          %s161 = scalar_lea.sflag [#allocation4], %s160
          %s162 = sand.u32 %s62, 1
          %s163 = smul.addr %s162, 256
          %s164 = scalar_lea.vmem [#allocation3], %s163
          %s165 = smul.u32 64, %s20
          %167 = vsyncadd %s161, 0
          %s168 = smul.addr %s165, 2
          %s169 = sadd.s32 %s19, %s168
          %s170 = smul.addr %s169, 4
          %s171 = scalar_lea.hbm %s1, %s170
          %s172 = sshll.u32 %s171, 4
          %s173 = int_to_ptr.hbm [resolvable:$true] %s172
          %s174 = sshll.u32 %s164, 4
          %s175 = int_to_ptr.vmem [resolvable:$true] %s174
          %180 = dma.hbm_to_vmem [thread:$0]  %s173, 4096, %s175, %s161, 128, 64, 4
        $region24: #{image_decoder_forward.2} parent=19 // pred_fallthru
          _
        // Predicated region
        $region25: #{image_decoder_forward.2} parent=19 // pred_check
          %p181 = pneg %p98
        $region26: #{image_decoder_forward.2} parent=19 // pred_check_branch
          %183 = sbr.rel (%p181) target = $region28
        $region27: #{image_decoder_forward.2} parent=19 // pred_region
          %p184 = scmp.lt.s32.totalorder %s19, 1
          %s185 = scalar_select %p184, %s19, 1
          %s186 = scalar_lea.vmem %s2, %s185
        $region28: #{image_decoder_forward.2} parent=19 // pred_fallthru
          _
      $region20: #{image_decoder_forward.2} parent=5 // pred_fallthru
        _
      %p187 = scmp.le.s32.totalorder 1, %s12
      %p188 = scmp.lt.s32.totalorder %s12, 3
      %p189 = pnand %p187, %p188
      %p190 = pneg %p189
      // Predicated region
      $region29: #{image_decoder_forward.2} parent=5 // pred_check
        _
      $region30: #{image_decoder_forward.2} parent=5 // pred_check_branch
        %192 = sbr.rel (%p189) target = $region32
      $region31: #{image_decoder_forward.2} parent=5 // pred_region
        %s193 = ssub.s32 %s12, 1
        %s194 = sand.u32 %s65, 1
        %s195 = scalar_lea.sflag [#allocation4], %s194
        %s196 = sand.u32 %s65, 1
        %s197 = smul.addr %s196, 256
        %s198 = scalar_lea.vmem [#allocation3], %s197
        // Predicated region
        $region33: #{image_decoder_forward.2} parent=31 // pred_check
          %p199 = pneg %p78
        $region34: #{image_decoder_forward.2} parent=31 // pred_check_branch
          %201 = sbr.rel (%p199) target = $region36
        $region35: #{image_decoder_forward.2} parent=31 // pred_region
          %203 = dma.done %s195, 4096
        $region36: #{image_decoder_forward.2} parent=31 // pred_fallthru
          _
        %s204 = smul.u32 4, %s22
        %p205 = scmp.lt.s32.totalorder %s204, 3
        %s206 = scalar_select %p205, %s204, 3
        %s207 = scalar_lea.vmem %s0, %s206
        %p208 = pneg %p50
        %p209 = pneg %p47
        %s210 = sand.u32 %s65, 1
        %s211 = scalar_lea.sflag [#allocation4], %s210
        %s212 = sand.u32 %s65, 1
        %s213 = smul.addr %s212, 256
        %s214 = scalar_lea.vmem [#allocation3], %s213
        %p215 = pneg %p78
        %p216 = pneg %p75
        %p217 = scmp.lt.s32.totalorder %s21, 1
        %s218 = scalar_select %p217, %s21, 1
        %s219 = scalar_lea.vmem %s2, %s218
        %p220 = pneg %p104
        %p221 = pneg %p101
        %p222 = pneg %p130
        %p223 = pneg %p127
        %p224 = scmp.lt.s32.totalorder %s21, 1
        %s225 = scalar_select %p224, %s21, 1
        %s226 = smul.addr %s225, 2
        %s227 = scalar_lea.vmem %s3, %s226
        %s228 = smul.u32 4, %s22
        %p229 = scmp.lt.s32.totalorder %s228, 3
        %s230 = scalar_select %p229, %s228, 3
        %s231 = scalar_lea.vmem %s0, %s230
        %s232 = smul.u32 4, %s22
        %s233 = smul.u32 64, %s22
        %p234 = scmp.lt.s32.totalorder %s21, 1
        %s235 = scalar_select %p234, %s21, 1
        %s236 = scalar_lea.vmem %s2, %s235
        %p237 = scmp.lt.s32.totalorder %s21, 1
        %s238 = scalar_select %p237, %s21, 1
        %s239 = smul.addr %s238, 2
        %s240 = scalar_lea.vmem %s3, %s239
        %p241 = scmp.eq.s32.totalorder %s22, 0
        // Predicated region
        $region37: #{image_decoder_forward.2} parent=31 // pred_check
          %p242 = pneg %p241
        $region38: #{image_decoder_forward.2} parent=31 // pred_check_branch
          %244 = sbr.rel (%p242) target = $region40
        $region39: #{image_decoder_forward.2} parent=31 // pred_region
          %245 = vst [vmem:[#allocation2] sm:$0x3] 0.0
        $region40: #{image_decoder_forward.2} parent=31 // pred_fallthru
          _
        %v246 = vld [vmem:[#allocation2] sm:$0x3]
        %v247 = vld [vmem:[%s231] sm:$0xf]
        %v248 = vld [vmem:[%s198] sm:$0xf]
        %v249 = vld [vmem:[%s198 + $0x4] sm:$0xf]
        %v250 = vld [vmem:[%s198 + $0x8] sm:$0xf]
        %v251 = vld [vmem:[%s198 + $0xc] sm:$0xf]
        %v252 = vld [vmem:[%s198 + $0x10] sm:$0xf]
        %v253 = vld [vmem:[%s198 + $0x14] sm:$0xf]
        %v254 = vld [vmem:[%s198 + $0x18] sm:$0xf]
        %v255 = vld [vmem:[%s198 + $0x1c] sm:$0xf]
        %v256 = vld [vmem:[%s198 + $0x20] sm:$0xf]
        %v257 = vld [vmem:[%s198 + $0x24] sm:$0xf]
        %v258 = vld [vmem:[%s198 + $0x28] sm:$0xf]
        %v259 = vld [vmem:[%s198 + $0x2c] sm:$0xf]
        %v260 = vld [vmem:[%s198 + $0x30] sm:$0xf]
        %v261 = vld [vmem:[%s198 + $0x34] sm:$0xf]
        %v262 = vld [vmem:[%s198 + $0x38] sm:$0xf]
        %v263 = vld [vmem:[%s198 + $0x3c] sm:$0xf]
        %v264 = vld [vmem:[%s198 + $0x40] sm:$0xf]
        %v265 = vld [vmem:[%s198 + $0x44] sm:$0xf]
        %v266 = vld [vmem:[%s198 + $0x48] sm:$0xf]
        %v267 = vld [vmem:[%s198 + $0x4c] sm:$0xf]
        %v268 = vld [vmem:[%s198 + $0x50] sm:$0xf]
        %v269 = vld [vmem:[%s198 + $0x54] sm:$0xf]
        %v270 = vld [vmem:[%s198 + $0x58] sm:$0xf]
        %v271 = vld [vmem:[%s198 + $0x5c] sm:$0xf]
        %v272 = vld [vmem:[%s198 + $0x60] sm:$0xf]
        %v273 = vld [vmem:[%s198 + $0x64] sm:$0xf]
        %v274 = vld [vmem:[%s198 + $0x68] sm:$0xf]
        %v275 = vld [vmem:[%s198 + $0x6c] sm:$0xf]
        %v276 = vld [vmem:[%s198 + $0x70] sm:$0xf]
        %v277 = vld [vmem:[%s198 + $0x74] sm:$0xf]
        %v278 = vld [vmem:[%s198 + $0x78] sm:$0xf]
        %v279 = vld [vmem:[%s198 + $0x7c] sm:$0xf]
        %v280 = vld [vmem:[%s198 + $0x80] sm:$0xf]
        %v281 = vld [vmem:[%s198 + $0x84] sm:$0xf]
        %v282 = vld [vmem:[%s198 + $0x88] sm:$0xf]
        %v283 = vld [vmem:[%s198 + $0x8c] sm:$0xf]
        %v284 = vld [vmem:[%s198 + $0x90] sm:$0xf]
        %v285 = vld [vmem:[%s198 + $0x94] sm:$0xf]
        %v286 = vld [vmem:[%s198 + $0x98] sm:$0xf]
        %v287 = vld [vmem:[%s198 + $0x9c] sm:$0xf]
        %v288 = vld [vmem:[%s198 + $0xa0] sm:$0xf]
        %v289 = vld [vmem:[%s198 + $0xa4] sm:$0xf]
        %v290 = vld [vmem:[%s198 + $0xa8] sm:$0xf]
        %v291 = vld [vmem:[%s198 + $0xac] sm:$0xf]
        %v292 = vld [vmem:[%s198 + $0xb0] sm:$0xf]
        %v293 = vld [vmem:[%s198 + $0xb4] sm:$0xf]
        %v294 = vld [vmem:[%s198 + $0xb8] sm:$0xf]
        %v295 = vld [vmem:[%s198 + $0xbc] sm:$0xf]
        %v296 = vld [vmem:[%s198 + $0xc0] sm:$0xf]
        %v297 = vld [vmem:[%s198 + $0xc4] sm:$0xf]
        %v298 = vld [vmem:[%s198 + $0xc8] sm:$0xf]
        %v299 = vld [vmem:[%s198 + $0xcc] sm:$0xf]
        %v300 = vld [vmem:[%s198 + $0xd0] sm:$0xf]
        %v301 = vld [vmem:[%s198 + $0xd4] sm:$0xf]
        %v302 = vld [vmem:[%s198 + $0xd8] sm:$0xf]
        %v303 = vld [vmem:[%s198 + $0xdc] sm:$0xf]
        %v304 = vld [vmem:[%s198 + $0xe0] sm:$0xf]
        %v305 = vld [vmem:[%s198 + $0xe4] sm:$0xf]
        %v306 = vld [vmem:[%s198 + $0xe8] sm:$0xf]
        %v307 = vld [vmem:[%s198 + $0xec] sm:$0xf]
        %v308 = vld [vmem:[%s198 + $0xf0] sm:$0xf]
        %v309 = vld [vmem:[%s198 + $0xf4] sm:$0xf]
        %v310 = vld [vmem:[%s198 + $0xf8] sm:$0xf]
        %v311 = vld [vmem:[%s198 + $0xfc] sm:$0xf]
        %313 = vst [vmem:[#allocation1] ss:$9 sm:$0xff] %v247
        %v314 = vld [vmem:[#allocation1] sm:$0xff]
        %v315 = vld [vmem:[#allocation1 + $0x9] sm:$0xff]
        %v316 = vld [vmem:[#allocation1 + $0x12] sm:$0xff]
        %v317 = vld [vmem:[#allocation1 + $0x1b] sm:$0xff]
        %v386 = vunpack.c.l.b16 %v248
        %v387 = vunpack.c.l.b16 %v249
        %v388 = vunpack.c.l.b16 %v250
        %v389 = vunpack.c.l.b16 %v251
        %v390 = vunpack.c.l.b16 %v252
        %v391 = vunpack.c.l.b16 %v253
        %v392 = vunpack.c.l.b16 %v254
        %v393 = vunpack.c.l.b16 %v255
        %v394 = vunpack.c.l.b16 %v256
        %v395 = vunpack.c.l.b16 %v257
        %v396 = vunpack.c.l.b16 %v258
        %v397 = vunpack.c.l.b16 %v259
        %v398 = vunpack.c.l.b16 %v260
        %v399 = vunpack.c.l.b16 %v261
        %v400 = vunpack.c.l.b16 %v262
        %v401 = vunpack.c.l.b16 %v263
        %v402 = vunpack.c.l.b16 %v264
        %v403 = vunpack.c.l.b16 %v265
        %v404 = vunpack.c.l.b16 %v266
        %v405 = vunpack.c.l.b16 %v267
        %v406 = vunpack.c.l.b16 %v268
        %v407 = vunpack.c.l.b16 %v269
        %v408 = vunpack.c.l.b16 %v270
        %v409 = vunpack.c.l.b16 %v271
        %v410 = vunpack.c.l.b16 %v272
        %v411 = vunpack.c.l.b16 %v273
        %v412 = vunpack.c.l.b16 %v274
        %v413 = vunpack.c.l.b16 %v275
        %v414 = vunpack.c.l.b16 %v276
        %v415 = vunpack.c.l.b16 %v277
        %v416 = vunpack.c.l.b16 %v278
        %v417 = vunpack.c.l.b16 %v279
        %v418 = vunpack.c.l.b16 %v280
        %v419 = vunpack.c.l.b16 %v281
        %v420 = vunpack.c.l.b16 %v282
        %v421 = vunpack.c.l.b16 %v283
        %v422 = vunpack.c.l.b16 %v284
        %v423 = vunpack.c.l.b16 %v285
        %v424 = vunpack.c.l.b16 %v286
        %v425 = vunpack.c.l.b16 %v287
        %v426 = vunpack.c.l.b16 %v288
        %v427 = vunpack.c.l.b16 %v289
        %v428 = vunpack.c.l.b16 %v290
        %v429 = vunpack.c.l.b16 %v291
        %v430 = vunpack.c.l.b16 %v292
        %v431 = vunpack.c.l.b16 %v293
        %v432 = vunpack.c.l.b16 %v294
        %v433 = vunpack.c.l.b16 %v295
        %v434 = vunpack.c.l.b16 %v296
        %v435 = vunpack.c.l.b16 %v297
        %v436 = vunpack.c.l.b16 %v298
        %v437 = vunpack.c.l.b16 %v299
        %v438 = vunpack.c.l.b16 %v300
        %v439 = vunpack.c.l.b16 %v301
        %v440 = vunpack.c.l.b16 %v302
        %v441 = vunpack.c.l.b16 %v303
        %v442 = vunpack.c.l.b16 %v304
        %v443 = vunpack.c.l.b16 %v305
        %v444 = vunpack.c.l.b16 %v306
        %v445 = vunpack.c.l.b16 %v307
        %v446 = vunpack.c.l.b16 %v308
        %v447 = vunpack.c.l.b16 %v309
        %v448 = vunpack.c.l.b16 %v310
        %v449 = vunpack.c.l.b16 %v311
        %v450 = vpack.c.b16 %v387, %v386
        %v451 = vpack.c.b16 %v389, %v388
        %v452 = vpack.c.b16 %v391, %v390
        %v453 = vpack.c.b16 %v393, %v392
        %v454 = vpack.c.b16 %v395, %v394
        %v455 = vpack.c.b16 %v397, %v396
        %v456 = vpack.c.b16 %v399, %v398
        %v457 = vpack.c.b16 %v401, %v400
        %v458 = vpack.c.b16 %v403, %v402
        %v459 = vpack.c.b16 %v405, %v404
        %v460 = vpack.c.b16 %v407, %v406
        %v461 = vpack.c.b16 %v409, %v408
        %v462 = vpack.c.b16 %v411, %v410
        %v463 = vpack.c.b16 %v413, %v412
        %v464 = vpack.c.b16 %v415, %v414
        %v465 = vpack.c.b16 %v417, %v416
        %v466 = vpack.c.b16 %v419, %v418
        %v467 = vpack.c.b16 %v421, %v420
        %v468 = vpack.c.b16 %v423, %v422
        %v469 = vpack.c.b16 %v425, %v424
        %v470 = vpack.c.b16 %v427, %v426
        %v471 = vpack.c.b16 %v429, %v428
        %v472 = vpack.c.b16 %v431, %v430
        %v473 = vpack.c.b16 %v433, %v432
        %v474 = vpack.c.b16 %v435, %v434
        %v475 = vpack.c.b16 %v437, %v436
        %v476 = vpack.c.b16 %v439, %v438
        %v477 = vpack.c.b16 %v441, %v440
        %v478 = vpack.c.b16 %v443, %v442
        %v479 = vpack.c.b16 %v445, %v444
        %v480 = vpack.c.b16 %v447, %v446
        %v481 = vpack.c.b16 %v449, %v448
        %514 = vmatpush.bf16.msra.mxu0 %v457
        %515 = vmatpush.bf16.msra.mxu0 %v456
        %516 = vmatpush.bf16.msra.mxu0 %v455
        %517 = vmatpush.bf16.msra.mxu0 %v454
        %518 = vmatpush.bf16.msra.mxu0 %v453
        %519 = vmatpush.bf16.msra.mxu0 %v452
        %520 = vmatpush.bf16.msra.mxu0 %v451
        %521 = vmatpush.bf16.msra.mxu0 %v450
        %522 = vmatmul.bf16.gmra.mxu0 %v314
        %v523 = vpop.f32.mrf.mxu0
        %v524 = vadd.f32 0.0, %v523
        %v525 = vpop.f32.mrf.mxu0
        %526 = vdwg.mxu0
        %527 = vmatpush.bf16.msra.mxu0 %v465
        %528 = vmatpush.bf16.msra.mxu0 %v464
        %529 = vmatpush.bf16.msra.mxu0 %v463
        %530 = vmatpush.bf16.msra.mxu0 %v462
        %531 = vmatpush.bf16.msra.mxu0 %v461
        %532 = vmatpush.bf16.msra.mxu0 %v460
        %533 = vmatpush.bf16.msra.mxu0 %v459
        %534 = vmatpush.bf16.msra.mxu0 %v458
        %535 = vmatmul.bf16.gmra.mxu0 %v315
        %v536 = vpop.f32.mrf.mxu0
        %v537 = vadd.f32 %v524, %v536
        %v538 = vpop.f32.mrf.mxu0
        %539 = vdwg.mxu0
        %540 = vmatpush.bf16.msra.mxu0 %v473
        %541 = vmatpush.bf16.msra.mxu0 %v472
        %542 = vmatpush.bf16.msra.mxu0 %v471
        %543 = vmatpush.bf16.msra.mxu0 %v470
        %544 = vmatpush.bf16.msra.mxu0 %v469
        %545 = vmatpush.bf16.msra.mxu0 %v468
        %546 = vmatpush.bf16.msra.mxu0 %v467
        %547 = vmatpush.bf16.msra.mxu0 %v466
        %548 = vmatmul.bf16.gmra.mxu0 %v316
        %v549 = vpop.f32.mrf.mxu0
        %v550 = vadd.f32 %v537, %v549
        %v551 = vpop.f32.mrf.mxu0
        %552 = vdwg.mxu0
        %553 = vmatpush.bf16.msra.mxu0 %v481
        %554 = vmatpush.bf16.msra.mxu0 %v480
        %555 = vmatpush.bf16.msra.mxu0 %v479
        %556 = vmatpush.bf16.msra.mxu0 %v478
        %557 = vmatpush.bf16.msra.mxu0 %v477
        %558 = vmatpush.bf16.msra.mxu0 %v476
        %559 = vmatpush.bf16.msra.mxu0 %v475
        %560 = vmatpush.bf16.msra.mxu0 %v474
        %561 = vmatmul.bf16.gmra.mxu0 %v317
        %v562 = vpop.f32.mrf.mxu0
        %v563 = vadd.f32 %v550, %v562
        %v564 = vpop.f32.mrf.mxu0
        %565 = vdwg.mxu0
        %v566 = vadd.f32 %v246, %v563
        %567 = vst [vmem:[#allocation2] sm:$0x3] %v566
        // Predicated region
        $region41: #{image_decoder_forward.2} parent=31 // pred_check
          %p568 = pneg %p241
        $region42: #{image_decoder_forward.2} parent=31 // pred_check_branch
          %570 = sbr.rel (%p568) target = $region44
        $region43: #{image_decoder_forward.2} parent=31 // pred_region
          %v571 = vld [vmem:[#allocation2] sm:$0x3]
          %v572 = vld [vmem:[%s236] sm:$0x1]
          %v574 = vperm.slane %v572, 0
          %v576 = vadd.f32 %v571, %v574
          %v577 = vmax.f32 %v576, 0.0
          %578 = vst [vmem:[%s240] sm:$0x3] %v577
        $region44: #{image_decoder_forward.2} parent=31 // pred_fallthru
          _
        %p579 = scmp.lt.s32.totalorder %s21, 1
        %s580 = scalar_select %p579, %s21, 1
        %s581 = smul.addr %s580, 2
        %s582 = scalar_lea.vmem %s3, %s581
        // Predicated region
        $region45: #{image_decoder_forward.2} parent=31 // pred_check
          %p583 = pneg %p127
        $region46: #{image_decoder_forward.2} parent=31 // pred_check_branch
          %585 = sbr.rel (%p583) target = $region48
        $region47: #{image_decoder_forward.2} parent=31 // pred_region
          _
        $region48: #{image_decoder_forward.2} parent=31 // pred_fallthru
          _
      $region32: #{image_decoder_forward.2} parent=5 // pred_fallthru
        _
      %p586 = scmp.le.s32.totalorder 2, %s12
      // Predicated region
      $region49: #{image_decoder_forward.2} parent=5 // pred_check
        %p587 = pneg %p586
      $region50: #{image_decoder_forward.2} parent=5 // pred_check_branch
        %589 = sbr.rel (%p587) target = $region52
      $region51: #{image_decoder_forward.2} parent=5 // pred_region
        %s590 = ssub.s32 %s12, 2
        // Predicated region
        $region53: #{image_decoder_forward.2} parent=51 // pred_check
          %p591 = pneg %p133
        $region54: #{image_decoder_forward.2} parent=51 // pred_check_branch
          %593 = sbr.rel (%p591) target = $region56
        $region55: #{image_decoder_forward.2} parent=51 // pred_region
          %p594 = scmp.lt.s32.totalorder %s23, 1
          %s595 = scalar_select %p594, %s23, 1
          %s596 = smul.addr %s595, 2
          %s597 = scalar_lea.vmem %s3, %s596
        $region56: #{image_decoder_forward.2} parent=51 // pred_fallthru
          _
      $region52: #{image_decoder_forward.2} parent=5 // pred_fallthru
        _
    $region6: #{image_decoder_forward.2} parent=1 // loop_footer
      %s16 = sadd.s32 1, %s12
    $region7: #{image_decoder_forward.2} parent=1 // loop_footer_branch
      %11 = sbr.rel target = $region3
    $region8: #{image_decoder_forward.2} parent=1 // loop_exit
      _
    %598 = vsyncpa [#allocation4], 1
    %s599 = scalar_lea.sflag [#allocation4], 1
    %600 = vsyncpa %s599, 1

// kernel: image_decoder_forward.3
$region0: #{image_decoder_forward.3}
  #allocation0 [shape = 'u32[]', space=smem, size = 0x4, offset = 0x4, fixed_abs, tag = 'smem constant byte address 0x4 - core index']
  #allocation1 [shape = 'u32[72,128]{1,0:T(1,128)}', space=vmem, size = 0x9000, scoped, tag = 'internal scratch']
  %s0 = inlined_call_operand.vmem [shape: bf16[2,256], index: 0, kind: input, shape index: {}]
  %s1 = inlined_call_operand.hbm [shape: bf16[256,768], index: 1, kind: input, shape index: {}]
  %s2 = inlined_call_operand.vmem [shape: f32[1,768], index: 2, kind: input, shape index: {}]
  %s3 = inlined_call_operand.vmem [shape: f32[2,768], index: 3, kind: output, shape index: {}]
  %s4 = sld [smem:[#allocation0]]
  $region26: #{image_decoder_forward.3} parent=0
    _
  %s6 = ssub.s32 1, %s4
  %s7 = scalar_select 0, %s6, %s4
  $region1: #{image_decoder_forward.3} parent=0
    #allocation2 [shape = 'u8[393216]{0}', space=vmem, size = 0x60000, scoped, tag = 'input window, operand 1, single buffered']
    #allocation3 [shape = 's32[1]{0}', space=sflag, size = 0x4, scoped, tag = 'scoped memory for image_decoder_forward.3']
    %8 = vsyncpa [#allocation3], 0
    // Predicated region
    $region2: #{image_decoder_forward.3} parent=1 // pred_check
      _
    $region3: #{image_decoder_forward.3} parent=1 // pred_check_branch
      %10 = sbr.rel (0) target = $region5
    $region4: #{image_decoder_forward.3} parent=1 // pred_region
      _
    $region5: #{image_decoder_forward.3} parent=1 // pred_fallthru
      _
    // Predicated region
    $region6: #{image_decoder_forward.3} parent=1 // pred_check
      _
    $region7: #{image_decoder_forward.3} parent=1 // pred_check_branch
      %12 = sbr.rel (0) target = $region9
    $region8: #{image_decoder_forward.3} parent=1 // pred_region
      %14 = vsyncadd [#allocation3], 0
      %s15 = sshll.u32 %s1, 4
      %s16 = int_to_ptr.hbm [resolvable:$true] %s15
      %s17 = sshll.u32 [#allocation2], 4
      %s18 = int_to_ptr.vmem [resolvable:$true] %s17
      %23 = dma.hbm_to_vmem [thread:$0]  %s16, 12288, %s18, [#allocation3], 384, 384, 24
    $region9: #{image_decoder_forward.3} parent=1 // pred_fallthru
      _
    // Predicated region
    $region10: #{image_decoder_forward.3} parent=1 // pred_check
      _
    $region11: #{image_decoder_forward.3} parent=1 // pred_check_branch
      %25 = sbr.rel (0) target = $region13
    $region12: #{image_decoder_forward.3} parent=1 // pred_region
      _
    $region13: #{image_decoder_forward.3} parent=1 // pred_fallthru
      _
    // Predicated region
    $region14: #{image_decoder_forward.3} parent=1 // pred_check
      _
    $region15: #{image_decoder_forward.3} parent=1 // pred_check_branch
      %27 = sbr.rel (0) target = $region17
    $region16: #{image_decoder_forward.3} parent=1 // pred_region
      %29 = dma.done [#allocation3], 12288
    $region17: #{image_decoder_forward.3} parent=1 // pred_fallthru
      _
    %v30 = vld [vmem:[%s0] sm:$0x3]
    %v31 = vld [vmem:[#allocation2] sm:$0xff]
    %v32 = vld [vmem:[#allocation2 + $0x8] sm:$0xff]
    %v33 = vld [vmem:[#allocation2 + $0x10] sm:$0xff]
    %v34 = vld [vmem:[#allocation2 + $0x18] sm:$0xff]
    %v35 = vld [vmem:[#allocation2 + $0x20] sm:$0xff]
    %v36 = vld [vmem:[#allocation2 + $0x28] sm:$0xff]
    %v37 = vld [vmem:[#allocation2 + $0x30] sm:$0xff]
    %v38 = vld [vmem:[#allocation2 + $0x38] sm:$0xff]
    %v39 = vld [vmem:[#allocation2 + $0x40] sm:$0xff]
    %v40 = vld [vmem:[#allocation2 + $0x48] sm:$0xff]
    %v41 = vld [vmem:[#allocation2 + $0x50] sm:$0xff]
    %v42 = vld [vmem:[#allocation2 + $0x58] sm:$0xff]
    %v43 = vld [vmem:[#allocation2 + $0x60] sm:$0xff]
    %v44 = vld [vmem:[#allocation2 + $0x68] sm:$0xff]
    %v45 = vld [vmem:[#allocation2 + $0x70] sm:$0xff]
    %v46 = vld [vmem:[#allocation2 + $0x78] sm:$0xff]
    %v47 = vld [vmem:[#allocation2 + $0x80] sm:$0xff]
    %v48 = vld [vmem:[#allocation2 + $0x88] sm:$0xff]
    %v49 = vld [vmem:[#allocation2 + $0x90] sm:$0xff]
    %v50 = vld [vmem:[#allocation2 + $0x98] sm:$0xff]
    %v51 = vld [vmem:[#allocation2 + $0xa0] sm:$0xff]
    %v52 = vld [vmem:[#allocation2 + $0xa8] sm:$0xff]
    %v53 = vld [vmem:[#allocation2 + $0xb0] sm:$0xff]
    %v54 = vld [vmem:[#allocation2 + $0xb8] sm:$0xff]
    %v55 = vld [vmem:[#allocation2 + $0xc0] sm:$0xff]
    %v56 = vld [vmem:[#allocation2 + $0xc8] sm:$0xff]
    %v57 = vld [vmem:[#allocation2 + $0xd0] sm:$0xff]
    %v58 = vld [vmem:[#allocation2 + $0xd8] sm:$0xff]
    %v59 = vld [vmem:[#allocation2 + $0xe0] sm:$0xff]
    %v60 = vld [vmem:[#allocation2 + $0xe8] sm:$0xff]
    %v61 = vld [vmem:[#allocation2 + $0xf0] sm:$0xff]
    %v62 = vld [vmem:[#allocation2 + $0xf8] sm:$0xff]
    %v63 = vld [vmem:[#allocation2 + $0x100] sm:$0xff]
    %v64 = vld [vmem:[#allocation2 + $0x108] sm:$0xff]
    %v65 = vld [vmem:[#allocation2 + $0x110] sm:$0xff]
    %v66 = vld [vmem:[#allocation2 + $0x118] sm:$0xff]
    %v67 = vld [vmem:[#allocation2 + $0x120] sm:$0xff]
    %v68 = vld [vmem:[#allocation2 + $0x128] sm:$0xff]
    %v69 = vld [vmem:[#allocation2 + $0x130] sm:$0xff]
    %v70 = vld [vmem:[#allocation2 + $0x138] sm:$0xff]
    %v71 = vld [vmem:[#allocation2 + $0x140] sm:$0xff]
    %v72 = vld [vmem:[#allocation2 + $0x148] sm:$0xff]
    %v73 = vld [vmem:[#allocation2 + $0x150] sm:$0xff]
    %v74 = vld [vmem:[#allocation2 + $0x158] sm:$0xff]
    %v75 = vld [vmem:[#allocation2 + $0x160] sm:$0xff]
    %v76 = vld [vmem:[#allocation2 + $0x168] sm:$0xff]
    %v77 = vld [vmem:[#allocation2 + $0x170] sm:$0xff]
    %v78 = vld [vmem:[#allocation2 + $0x178] sm:$0xff]
    %v79 = vld [vmem:[#allocation2 + $0x180] sm:$0xff]
    %v80 = vld [vmem:[#allocation2 + $0x188] sm:$0xff]
    %v81 = vld [vmem:[#allocation2 + $0x190] sm:$0xff]
    %v82 = vld [vmem:[#allocation2 + $0x198] sm:$0xff]
    %v83 = vld [vmem:[#allocation2 + $0x1a0] sm:$0xff]
    %v84 = vld [vmem:[#allocation2 + $0x1a8] sm:$0xff]
    %v85 = vld [vmem:[#allocation2 + $0x1b0] sm:$0xff]
    %v86 = vld [vmem:[#allocation2 + $0x1b8] sm:$0xff]
    %v87 = vld [vmem:[#allocation2 + $0x1c0] sm:$0xff]
    %v88 = vld [vmem:[#allocation2 + $0x1c8] sm:$0xff]
    %v89 = vld [vmem:[#allocation2 + $0x1d0] sm:$0xff]
    %v90 = vld [vmem:[#allocation2 + $0x1d8] sm:$0xff]
    %v91 = vld [vmem:[#allocation2 + $0x1e0] sm:$0xff]
    %v92 = vld [vmem:[#allocation2 + $0x1e8] sm:$0xff]
    %v93 = vld [vmem:[#allocation2 + $0x1f0] sm:$0xff]
    %v94 = vld [vmem:[#allocation2 + $0x1f8] sm:$0xff]
    %v95 = vld [vmem:[#allocation2 + $0x200] sm:$0xff]
    %v96 = vld [vmem:[#allocation2 + $0x208] sm:$0xff]
    %v97 = vld [vmem:[#allocation2 + $0x210] sm:$0xff]
    %v98 = vld [vmem:[#allocation2 + $0x218] sm:$0xff]
    %v99 = vld [vmem:[#allocation2 + $0x220] sm:$0xff]
    %v100 = vld [vmem:[#allocation2 + $0x228] sm:$0xff]
    %v101 = vld [vmem:[#allocation2 + $0x230] sm:$0xff]
    %v102 = vld [vmem:[#allocation2 + $0x238] sm:$0xff]
    %v103 = vld [vmem:[#allocation2 + $0x240] sm:$0xff]
    %v104 = vld [vmem:[#allocation2 + $0x248] sm:$0xff]
    %v105 = vld [vmem:[#allocation2 + $0x250] sm:$0xff]
    %v106 = vld [vmem:[#allocation2 + $0x258] sm:$0xff]
    %v107 = vld [vmem:[#allocation2 + $0x260] sm:$0xff]
    %v108 = vld [vmem:[#allocation2 + $0x268] sm:$0xff]
    %v109 = vld [vmem:[#allocation2 + $0x270] sm:$0xff]
    %v110 = vld [vmem:[#allocation2 + $0x278] sm:$0xff]
    %v111 = vld [vmem:[#allocation2 + $0x280] sm:$0xff]
    %v112 = vld [vmem:[#allocation2 + $0x288] sm:$0xff]
    %v113 = vld [vmem:[#allocation2 + $0x290] sm:$0xff]
    %v114 = vld [vmem:[#allocation2 + $0x298] sm:$0xff]
    %v115 = vld [vmem:[#allocation2 + $0x2a0] sm:$0xff]
    %v116 = vld [vmem:[#allocation2 + $0x2a8] sm:$0xff]
    %v117 = vld [vmem:[#allocation2 + $0x2b0] sm:$0xff]
    %v118 = vld [vmem:[#allocation2 + $0x2b8] sm:$0xff]
    %v119 = vld [vmem:[#allocation2 + $0x2c0] sm:$0xff]
    %v120 = vld [vmem:[#allocation2 + $0x2c8] sm:$0xff]
    %v121 = vld [vmem:[#allocation2 + $0x2d0] sm:$0xff]
    %v122 = vld [vmem:[#allocation2 + $0x2d8] sm:$0xff]
    %v123 = vld [vmem:[#allocation2 + $0x2e0] sm:$0xff]
    %v124 = vld [vmem:[#allocation2 + $0x2e8] sm:$0xff]
    %v125 = vld [vmem:[#allocation2 + $0x2f0] sm:$0xff]
    %v126 = vld [vmem:[#allocation2 + $0x2f8] sm:$0xff]
    %v127 = vld [vmem:[%s2] sm:$0x3f]
    %v129 = vperm.slane %v127, 0
    %v130 = vperm.slane %v127, 1
    %v131 = vperm.slane %v127, 2
    %v132 = vperm.slane %v127, 3
    %v133 = vperm.slane %v127, 4
    %v134 = vperm.slane %v127, 5
    %142 = vst [vmem:[#allocation1] ss:$9 sm:$0xff] %v30
    %v143 = vld [vmem:[#allocation1] sm:$0xff]
    %v144 = vld [vmem:[#allocation1 + $0x9] sm:$0xff]
    %v243 = vunpack.c.l.b16 %v31
    %v244 = vunpack.c.h.b16 %v31
    %v245 = vunpack.c.l.b16 %v32
    %v246 = vunpack.c.h.b16 %v32
    %v247 = vunpack.c.l.b16 %v33
    %v248 = vunpack.c.h.b16 %v33
    %v249 = vunpack.c.l.b16 %v34
    %v250 = vunpack.c.h.b16 %v34
    %v251 = vunpack.c.l.b16 %v35
    %v252 = vunpack.c.h.b16 %v35
    %v253 = vunpack.c.l.b16 %v36
    %v254 = vunpack.c.h.b16 %v36
    %v255 = vunpack.c.l.b16 %v37
    %v256 = vunpack.c.h.b16 %v37
    %v257 = vunpack.c.l.b16 %v38
    %v258 = vunpack.c.h.b16 %v38
    %v259 = vunpack.c.l.b16 %v39
    %v260 = vunpack.c.h.b16 %v39
    %v261 = vunpack.c.l.b16 %v40
    %v262 = vunpack.c.h.b16 %v40
    %v263 = vunpack.c.l.b16 %v41
    %v264 = vunpack.c.h.b16 %v41
    %v265 = vunpack.c.l.b16 %v42
    %v266 = vunpack.c.h.b16 %v42
    %v267 = vunpack.c.l.b16 %v43
    %v268 = vunpack.c.h.b16 %v43
    %v269 = vunpack.c.l.b16 %v44
    %v270 = vunpack.c.h.b16 %v44
    %v271 = vunpack.c.l.b16 %v45
    %v272 = vunpack.c.h.b16 %v45
    %v273 = vunpack.c.l.b16 %v46
    %v274 = vunpack.c.h.b16 %v46
    %v275 = vunpack.c.l.b16 %v47
    %v276 = vunpack.c.h.b16 %v47
    %v277 = vunpack.c.l.b16 %v48
    %v278 = vunpack.c.h.b16 %v48
    %v279 = vunpack.c.l.b16 %v49
    %v280 = vunpack.c.h.b16 %v49
    %v281 = vunpack.c.l.b16 %v50
    %v282 = vunpack.c.h.b16 %v50
    %v283 = vunpack.c.l.b16 %v51
    %v284 = vunpack.c.h.b16 %v51
    %v285 = vunpack.c.l.b16 %v52
    %v286 = vunpack.c.h.b16 %v52
    %v287 = vunpack.c.l.b16 %v53
    %v288 = vunpack.c.h.b16 %v53
    %v289 = vunpack.c.l.b16 %v54
    %v290 = vunpack.c.h.b16 %v54
    %v291 = vunpack.c.l.b16 %v55
    %v292 = vunpack.c.h.b16 %v55
    %v293 = vunpack.c.l.b16 %v56
    %v294 = vunpack.c.h.b16 %v56
    %v295 = vunpack.c.l.b16 %v57
    %v296 = vunpack.c.h.b16 %v57
    %v297 = vunpack.c.l.b16 %v58
    %v298 = vunpack.c.h.b16 %v58
    %v299 = vunpack.c.l.b16 %v59
    %v300 = vunpack.c.h.b16 %v59
    %v301 = vunpack.c.l.b16 %v60
    %v302 = vunpack.c.h.b16 %v60
    %v303 = vunpack.c.l.b16 %v61
    %v304 = vunpack.c.h.b16 %v61
    %v305 = vunpack.c.l.b16 %v62
    %v306 = vunpack.c.h.b16 %v62
    %v307 = vunpack.c.l.b16 %v63
    %v308 = vunpack.c.h.b16 %v63
    %v309 = vunpack.c.l.b16 %v64
    %v310 = vunpack.c.h.b16 %v64
    %v311 = vunpack.c.l.b16 %v65
    %v312 = vunpack.c.h.b16 %v65
    %v313 = vunpack.c.l.b16 %v66
    %v314 = vunpack.c.h.b16 %v66
    %v315 = vunpack.c.l.b16 %v67
    %v316 = vunpack.c.h.b16 %v67
    %v317 = vunpack.c.l.b16 %v68
    %v318 = vunpack.c.h.b16 %v68
    %v319 = vunpack.c.l.b16 %v69
    %v320 = vunpack.c.h.b16 %v69
    %v321 = vunpack.c.l.b16 %v70
    %v322 = vunpack.c.h.b16 %v70
    %v323 = vunpack.c.l.b16 %v71
    %v324 = vunpack.c.h.b16 %v71
    %v325 = vunpack.c.l.b16 %v72
    %v326 = vunpack.c.h.b16 %v72
    %v327 = vunpack.c.l.b16 %v73
    %v328 = vunpack.c.h.b16 %v73
    %v329 = vunpack.c.l.b16 %v74
    %v330 = vunpack.c.h.b16 %v74
    %v331 = vunpack.c.l.b16 %v75
    %v332 = vunpack.c.h.b16 %v75
    %v333 = vunpack.c.l.b16 %v76
    %v334 = vunpack.c.h.b16 %v76
    %v335 = vunpack.c.l.b16 %v77
    %v336 = vunpack.c.h.b16 %v77
    %v337 = vunpack.c.l.b16 %v78
    %v338 = vunpack.c.h.b16 %v78
    %v339 = vunpack.c.l.b16 %v79
    %v340 = vunpack.c.h.b16 %v79
    %v341 = vunpack.c.l.b16 %v80
    %v342 = vunpack.c.h.b16 %v80
    %v343 = vunpack.c.l.b16 %v81
    %v344 = vunpack.c.h.b16 %v81
    %v345 = vunpack.c.l.b16 %v82
    %v346 = vunpack.c.h.b16 %v82
    %v347 = vunpack.c.l.b16 %v83
    %v348 = vunpack.c.h.b16 %v83
    %v349 = vunpack.c.l.b16 %v84
    %v350 = vunpack.c.h.b16 %v84
    %v351 = vunpack.c.l.b16 %v85
    %v352 = vunpack.c.h.b16 %v85
    %v353 = vunpack.c.l.b16 %v86
    %v354 = vunpack.c.h.b16 %v86
    %v355 = vunpack.c.l.b16 %v87
    %v356 = vunpack.c.h.b16 %v87
    %v357 = vunpack.c.l.b16 %v88
    %v358 = vunpack.c.h.b16 %v88
    %v359 = vunpack.c.l.b16 %v89
    %v360 = vunpack.c.h.b16 %v89
    %v361 = vunpack.c.l.b16 %v90
    %v362 = vunpack.c.h.b16 %v90
    %v363 = vunpack.c.l.b16 %v91
    %v364 = vunpack.c.h.b16 %v91
    %v365 = vunpack.c.l.b16 %v92
    %v366 = vunpack.c.h.b16 %v92
    %v367 = vunpack.c.l.b16 %v93
    %v368 = vunpack.c.h.b16 %v93
    %v369 = vunpack.c.l.b16 %v94
    %v370 = vunpack.c.h.b16 %v94
    %v371 = vunpack.c.l.b16 %v95
    %v372 = vunpack.c.h.b16 %v95
    %v373 = vunpack.c.l.b16 %v96
    %v374 = vunpack.c.h.b16 %v96
    %v375 = vunpack.c.l.b16 %v97
    %v376 = vunpack.c.h.b16 %v97
    %v377 = vunpack.c.l.b16 %v98
    %v378 = vunpack.c.h.b16 %v98
    %v379 = vunpack.c.l.b16 %v99
    %v380 = vunpack.c.h.b16 %v99
    %v381 = vunpack.c.l.b16 %v100
    %v382 = vunpack.c.h.b16 %v100
    %v383 = vunpack.c.l.b16 %v101
    %v384 = vunpack.c.h.b16 %v101
    %v385 = vunpack.c.l.b16 %v102
    %v386 = vunpack.c.h.b16 %v102
    %v387 = vunpack.c.l.b16 %v103
    %v388 = vunpack.c.h.b16 %v103
    %v389 = vunpack.c.l.b16 %v104
    %v390 = vunpack.c.h.b16 %v104
    %v391 = vunpack.c.l.b16 %v105
    %v392 = vunpack.c.h.b16 %v105
    %v393 = vunpack.c.l.b16 %v106
    %v394 = vunpack.c.h.b16 %v106
    %v395 = vunpack.c.l.b16 %v107
    %v396 = vunpack.c.h.b16 %v107
    %v397 = vunpack.c.l.b16 %v108
    %v398 = vunpack.c.h.b16 %v108
    %v399 = vunpack.c.l.b16 %v109
    %v400 = vunpack.c.h.b16 %v109
    %v401 = vunpack.c.l.b16 %v110
    %v402 = vunpack.c.h.b16 %v110
    %v403 = vunpack.c.l.b16 %v111
    %v404 = vunpack.c.h.b16 %v111
    %v405 = vunpack.c.l.b16 %v112
    %v406 = vunpack.c.h.b16 %v112
    %v407 = vunpack.c.l.b16 %v113
    %v408 = vunpack.c.h.b16 %v113
    %v409 = vunpack.c.l.b16 %v114
    %v410 = vunpack.c.h.b16 %v114
    %v411 = vunpack.c.l.b16 %v115
    %v412 = vunpack.c.h.b16 %v115
    %v413 = vunpack.c.l.b16 %v116
    %v414 = vunpack.c.h.b16 %v116
    %v415 = vunpack.c.l.b16 %v117
    %v416 = vunpack.c.h.b16 %v117
    %v417 = vunpack.c.l.b16 %v118
    %v418 = vunpack.c.h.b16 %v118
    %v419 = vunpack.c.l.b16 %v119
    %v420 = vunpack.c.h.b16 %v119
    %v421 = vunpack.c.l.b16 %v120
    %v422 = vunpack.c.h.b16 %v120
    %v423 = vunpack.c.l.b16 %v121
    %v424 = vunpack.c.h.b16 %v121
    %v425 = vunpack.c.l.b16 %v122
    %v426 = vunpack.c.h.b16 %v122
    %v427 = vunpack.c.l.b16 %v123
    %v428 = vunpack.c.h.b16 %v123
    %v429 = vunpack.c.l.b16 %v124
    %v430 = vunpack.c.h.b16 %v124
    %v431 = vunpack.c.l.b16 %v125
    %v432 = vunpack.c.h.b16 %v125
    %v433 = vunpack.c.l.b16 %v126
    %v434 = vunpack.c.h.b16 %v126
    %v435 = vpack.c.b16 %v249, %v243
    %v436 = vpack.c.b16 %v250, %v244
    %v437 = vpack.c.b16 %v251, %v245
    %v438 = vpack.c.b16 %v252, %v246
    %v439 = vpack.c.b16 %v253, %v247
    %v440 = vpack.c.b16 %v254, %v248
    %v441 = vpack.c.b16 %v261, %v255
    %v442 = vpack.c.b16 %v262, %v256
    %v443 = vpack.c.b16 %v263, %v257
    %v444 = vpack.c.b16 %v264, %v258
    %v445 = vpack.c.b16 %v265, %v259
    %v446 = vpack.c.b16 %v266, %v260
    %v447 = vpack.c.b16 %v273, %v267
    %v448 = vpack.c.b16 %v274, %v268
    %v449 = vpack.c.b16 %v275, %v269
    %v450 = vpack.c.b16 %v276, %v270
    %v451 = vpack.c.b16 %v277, %v271
    %v452 = vpack.c.b16 %v278, %v272
    %v453 = vpack.c.b16 %v285, %v279
    %v454 = vpack.c.b16 %v286, %v280
    %v455 = vpack.c.b16 %v287, %v281
    %v456 = vpack.c.b16 %v288, %v282
    %v457 = vpack.c.b16 %v289, %v283
    %v458 = vpack.c.b16 %v290, %v284
    %v459 = vpack.c.b16 %v297, %v291
    %v460 = vpack.c.b16 %v298, %v292
    %v461 = vpack.c.b16 %v299, %v293
    %v462 = vpack.c.b16 %v300, %v294
    %v463 = vpack.c.b16 %v301, %v295
    %v464 = vpack.c.b16 %v302, %v296
    %v465 = vpack.c.b16 %v309, %v303
    %v466 = vpack.c.b16 %v310, %v304
    %v467 = vpack.c.b16 %v311, %v305
    %v468 = vpack.c.b16 %v312, %v306
    %v469 = vpack.c.b16 %v313, %v307
    %v470 = vpack.c.b16 %v314, %v308
    %v471 = vpack.c.b16 %v321, %v315
    %v472 = vpack.c.b16 %v322, %v316
    %v473 = vpack.c.b16 %v323, %v317
    %v474 = vpack.c.b16 %v324, %v318
    %v475 = vpack.c.b16 %v325, %v319
    %v476 = vpack.c.b16 %v326, %v320
    %v477 = vpack.c.b16 %v333, %v327
    %v478 = vpack.c.b16 %v334, %v328
    %v479 = vpack.c.b16 %v335, %v329
    %v480 = vpack.c.b16 %v336, %v330
    %v481 = vpack.c.b16 %v337, %v331
    %v482 = vpack.c.b16 %v338, %v332
    %v483 = vpack.c.b16 %v345, %v339
    %v484 = vpack.c.b16 %v346, %v340
    %v485 = vpack.c.b16 %v347, %v341
    %v486 = vpack.c.b16 %v348, %v342
    %v487 = vpack.c.b16 %v349, %v343
    %v488 = vpack.c.b16 %v350, %v344
    %v489 = vpack.c.b16 %v357, %v351
    %v490 = vpack.c.b16 %v358, %v352
    %v491 = vpack.c.b16 %v359, %v353
    %v492 = vpack.c.b16 %v360, %v354
    %v493 = vpack.c.b16 %v361, %v355
    %v494 = vpack.c.b16 %v362, %v356
    %v495 = vpack.c.b16 %v369, %v363
    %v496 = vpack.c.b16 %v370, %v364
    %v497 = vpack.c.b16 %v371, %v365
    %v498 = vpack.c.b16 %v372, %v366
    %v499 = vpack.c.b16 %v373, %v367
    %v500 = vpack.c.b16 %v374, %v368
    %v501 = vpack.c.b16 %v381, %v375
    %v502 = vpack.c.b16 %v382, %v376
    %v503 = vpack.c.b16 %v383, %v377
    %v504 = vpack.c.b16 %v384, %v378
    %v505 = vpack.c.b16 %v385, %v379
    %v506 = vpack.c.b16 %v386, %v380
    %v507 = vpack.c.b16 %v393, %v387
    %v508 = vpack.c.b16 %v394, %v388
    %v509 = vpack.c.b16 %v395, %v389
    %v510 = vpack.c.b16 %v396, %v390
    %v511 = vpack.c.b16 %v397, %v391
    %v512 = vpack.c.b16 %v398, %v392
    %v513 = vpack.c.b16 %v405, %v399
    %v514 = vpack.c.b16 %v406, %v400
    %v515 = vpack.c.b16 %v407, %v401
    %v516 = vpack.c.b16 %v408, %v402
    %v517 = vpack.c.b16 %v409, %v403
    %v518 = vpack.c.b16 %v410, %v404
    %v519 = vpack.c.b16 %v417, %v411
    %v520 = vpack.c.b16 %v418, %v412
    %v521 = vpack.c.b16 %v419, %v413
    %v522 = vpack.c.b16 %v420, %v414
    %v523 = vpack.c.b16 %v421, %v415
    %v524 = vpack.c.b16 %v422, %v416
    %v525 = vpack.c.b16 %v429, %v423
    %v526 = vpack.c.b16 %v430, %v424
    %v527 = vpack.c.b16 %v431, %v425
    %v528 = vpack.c.b16 %v432, %v426
    %v529 = vpack.c.b16 %v433, %v427
    %v530 = vpack.c.b16 %v434, %v428
    %627 = vmatpush.bf16.msra.mxu0 %v477
    %628 = vmatpush.bf16.msra.mxu0 %v471
    %629 = vmatpush.bf16.msra.mxu0 %v465
    %630 = vmatpush.bf16.msra.mxu0 %v459
    %631 = vmatpush.bf16.msra.mxu0 %v453
    %632 = vmatpush.bf16.msra.mxu0 %v447
    %633 = vmatpush.bf16.msra.mxu0 %v441
    %634 = vmatpush.bf16.msra.mxu0 %v435
    %635 = vmatmul.bf16.gmra.mxu0 %v143
    %v636 = vpop.f32.mrf.mxu0
    %v637 = vadd.f32 %v129, %v636
    %v638 = vpop.f32.mrf.mxu0
    %639 = vdwg.mxu0
    %640 = vmatpush.bf16.msra.mxu0 %v525
    %641 = vmatpush.bf16.msra.mxu0 %v519
    %642 = vmatpush.bf16.msra.mxu0 %v513
    %643 = vmatpush.bf16.msra.mxu0 %v507
    %644 = vmatpush.bf16.msra.mxu0 %v501
    %645 = vmatpush.bf16.msra.mxu0 %v495
    %646 = vmatpush.bf16.msra.mxu0 %v489
    %647 = vmatpush.bf16.msra.mxu0 %v483
    %648 = vmatmul.bf16.gmra.mxu0 %v144
    %v649 = vpop.f32.mrf.mxu0
    %v650 = vadd.f32 %v637, %v649
    %v651 = vpop.f32.mrf.mxu0
    %652 = vdwg.mxu0
    %653 = vmatpush.bf16.msra.mxu0 %v478
    %654 = vmatpush.bf16.msra.mxu0 %v472
    %655 = vmatpush.bf16.msra.mxu0 %v466
    %656 = vmatpush.bf16.msra.mxu0 %v460
    %657 = vmatpush.bf16.msra.mxu0 %v454
    %658 = vmatpush.bf16.msra.mxu0 %v448
    %659 = vmatpush.bf16.msra.mxu0 %v442
    %660 = vmatpush.bf16.msra.mxu0 %v436
    %661 = vmatmul.bf16.gmra.mxu0 %v143
    %v662 = vpop.f32.mrf.mxu0
    %v663 = vadd.f32 %v130, %v662
    %v664 = vpop.f32.mrf.mxu0
    %665 = vdwg.mxu0
    %666 = vmatpush.bf16.msra.mxu0 %v526
    %667 = vmatpush.bf16.msra.mxu0 %v520
    %668 = vmatpush.bf16.msra.mxu0 %v514
    %669 = vmatpush.bf16.msra.mxu0 %v508
    %670 = vmatpush.bf16.msra.mxu0 %v502
    %671 = vmatpush.bf16.msra.mxu0 %v496
    %672 = vmatpush.bf16.msra.mxu0 %v490
    %673 = vmatpush.bf16.msra.mxu0 %v484
    %674 = vmatmul.bf16.gmra.mxu0 %v144
    %v675 = vpop.f32.mrf.mxu0
    %v676 = vadd.f32 %v663, %v675
    %v677 = vpop.f32.mrf.mxu0
    %678 = vdwg.mxu0
    %679 = vmatpush.bf16.msra.mxu0 %v479
    %680 = vmatpush.bf16.msra.mxu0 %v473
    %681 = vmatpush.bf16.msra.mxu0 %v467
    %682 = vmatpush.bf16.msra.mxu0 %v461
    %683 = vmatpush.bf16.msra.mxu0 %v455
    %684 = vmatpush.bf16.msra.mxu0 %v449
    %685 = vmatpush.bf16.msra.mxu0 %v443
    %686 = vmatpush.bf16.msra.mxu0 %v437
    %687 = vmatmul.bf16.gmra.mxu0 %v143
    %v688 = vpop.f32.mrf.mxu0
    %v689 = vadd.f32 %v131, %v688
    %v690 = vpop.f32.mrf.mxu0
    %691 = vdwg.mxu0
    %692 = vmatpush.bf16.msra.mxu0 %v527
    %693 = vmatpush.bf16.msra.mxu0 %v521
    %694 = vmatpush.bf16.msra.mxu0 %v515
    %695 = vmatpush.bf16.msra.mxu0 %v509
    %696 = vmatpush.bf16.msra.mxu0 %v503
    %697 = vmatpush.bf16.msra.mxu0 %v497
    %698 = vmatpush.bf16.msra.mxu0 %v491
    %699 = vmatpush.bf16.msra.mxu0 %v485
    %700 = vmatmul.bf16.gmra.mxu0 %v144
    %v701 = vpop.f32.mrf.mxu0
    %v702 = vadd.f32 %v689, %v701
    %v703 = vpop.f32.mrf.mxu0
    %704 = vdwg.mxu0
    %705 = vmatpush.bf16.msra.mxu0 %v480
    %706 = vmatpush.bf16.msra.mxu0 %v474
    %707 = vmatpush.bf16.msra.mxu0 %v468
    %708 = vmatpush.bf16.msra.mxu0 %v462
    %709 = vmatpush.bf16.msra.mxu0 %v456
    %710 = vmatpush.bf16.msra.mxu0 %v450
    %711 = vmatpush.bf16.msra.mxu0 %v444
    %712 = vmatpush.bf16.msra.mxu0 %v438
    %713 = vmatmul.bf16.gmra.mxu0 %v143
    %v714 = vpop.f32.mrf.mxu0
    %v715 = vadd.f32 %v132, %v714
    %v716 = vpop.f32.mrf.mxu0
    %717 = vdwg.mxu0
    %718 = vmatpush.bf16.msra.mxu0 %v528
    %719 = vmatpush.bf16.msra.mxu0 %v522
    %720 = vmatpush.bf16.msra.mxu0 %v516
    %721 = vmatpush.bf16.msra.mxu0 %v510
    %722 = vmatpush.bf16.msra.mxu0 %v504
    %723 = vmatpush.bf16.msra.mxu0 %v498
    %724 = vmatpush.bf16.msra.mxu0 %v492
    %725 = vmatpush.bf16.msra.mxu0 %v486
    %726 = vmatmul.bf16.gmra.mxu0 %v144
    %v727 = vpop.f32.mrf.mxu0
    %v728 = vadd.f32 %v715, %v727
    %v729 = vpop.f32.mrf.mxu0
    %730 = vdwg.mxu0
    %731 = vmatpush.bf16.msra.mxu0 %v481
    %732 = vmatpush.bf16.msra.mxu0 %v475
    %733 = vmatpush.bf16.msra.mxu0 %v469
    %734 = vmatpush.bf16.msra.mxu0 %v463
    %735 = vmatpush.bf16.msra.mxu0 %v457
    %736 = vmatpush.bf16.msra.mxu0 %v451
    %737 = vmatpush.bf16.msra.mxu0 %v445
    %738 = vmatpush.bf16.msra.mxu0 %v439
    %739 = vmatmul.bf16.gmra.mxu0 %v143
    %v740 = vpop.f32.mrf.mxu0
    %v741 = vadd.f32 %v133, %v740
    %v742 = vpop.f32.mrf.mxu0
    %743 = vdwg.mxu0
    %744 = vmatpush.bf16.msra.mxu0 %v529
    %745 = vmatpush.bf16.msra.mxu0 %v523
    %746 = vmatpush.bf16.msra.mxu0 %v517
    %747 = vmatpush.bf16.msra.mxu0 %v511
    %748 = vmatpush.bf16.msra.mxu0 %v505
    %749 = vmatpush.bf16.msra.mxu0 %v499
    %750 = vmatpush.bf16.msra.mxu0 %v493
    %751 = vmatpush.bf16.msra.mxu0 %v487
    %752 = vmatmul.bf16.gmra.mxu0 %v144
    %v753 = vpop.f32.mrf.mxu0
    %v754 = vadd.f32 %v741, %v753
    %v755 = vpop.f32.mrf.mxu0
    %756 = vdwg.mxu0
    %757 = vmatpush.bf16.msra.mxu0 %v482
    %758 = vmatpush.bf16.msra.mxu0 %v476
    %759 = vmatpush.bf16.msra.mxu0 %v470
    %760 = vmatpush.bf16.msra.mxu0 %v464
    %761 = vmatpush.bf16.msra.mxu0 %v458
    %762 = vmatpush.bf16.msra.mxu0 %v452
    %763 = vmatpush.bf16.msra.mxu0 %v446
    %764 = vmatpush.bf16.msra.mxu0 %v440
    %765 = vmatmul.bf16.gmra.mxu0 %v143
    %v766 = vpop.f32.mrf.mxu0
    %v767 = vadd.f32 %v134, %v766
    %v768 = vpop.f32.mrf.mxu0
    %769 = vdwg.mxu0
    %770 = vmatpush.bf16.msra.mxu0 %v530
    %771 = vmatpush.bf16.msra.mxu0 %v524
    %772 = vmatpush.bf16.msra.mxu0 %v518
    %773 = vmatpush.bf16.msra.mxu0 %v512
    %774 = vmatpush.bf16.msra.mxu0 %v506
    %775 = vmatpush.bf16.msra.mxu0 %v500
    %776 = vmatpush.bf16.msra.mxu0 %v494
    %777 = vmatpush.bf16.msra.mxu0 %v488
    %778 = vmatmul.bf16.gmra.mxu0 %v144
    %v779 = vpop.f32.mrf.mxu0
    %v780 = vadd.f32 %v767, %v779
    %v781 = vpop.f32.mrf.mxu0
    %782 = vdwg.mxu0
    %v783 = vtanh.pop %v650
    %v784 = vtanh.pop %v676
    %v785 = vtanh.pop %v702
    %v786 = vtanh.pop %v728
    %v787 = vtanh.pop %v754
    %v788 = vtanh.pop %v780
    %v795 = vrot.slane %v784, 6
    %v796 = vrot.slane %v785, 4
    %v797 = vrot.slane %v786, 2
    %v798 = vrot.slane %v788, 6
    %vm799 = vcmask 1041408
    %v800 = vsel %vm799, %v783, %v795
    %vm801 = vcmask 1045508
    %v802 = vsel %vm801, %v796, %v797
    %vm803 = vcmask 1043456
    %v804 = vsel %vm803, %v800, %v802
    %v805 = vsel %vm799, %v787, %v798
    %808 = vst [vmem:[%s3] sm:$0xff] %v804
    %809 = vst [vmem:[%s3 + $0x8] sm:$0xf] %v805
    // Predicated region
    $region18: #{image_decoder_forward.3} parent=1 // pred_check
      _
    $region19: #{image_decoder_forward.3} parent=1 // pred_check_branch
      %811 = sbr.rel (0) target = $region21
    $region20: #{image_decoder_forward.3} parent=1 // pred_region
      _
    $region21: #{image_decoder_forward.3} parent=1 // pred_fallthru
      _
    // Predicated region
    $region22: #{image_decoder_forward.3} parent=1 // pred_check
      _
    $region23: #{image_decoder_forward.3} parent=1 // pred_check_branch
      %813 = sbr.rel (0) target = $region25
    $region24: #{image_decoder_forward.3} parent=1 // pred_region
      _
    $region25: #{image_decoder_forward.3} parent=1 // pred_fallthru
      _
    %814 = vsyncpa [#allocation3], 1

</llo_original>
